<compile_context>
chip_gen: v6e
topology: v6e:2x2x1
jax: 0.10.0
libtpu: 0.0.40
codegen_flags: <defaults>
</compile_context>

<pallas_src>
import functools

import jax
import jax.numpy as jnp
from jax.experimental import pallas as pl
from jax.experimental.pallas import tpu as pltpu


def _se_kernel(x_ref, w1t_ref, w2t_ref, o_ref, *, inv_l):
    # x_ref  : (Bt, C, Lp)  slab of batch rows (full C, full padded L)
    # w1t_ref: (C, H)       first Linear weight, pre-transposed in wrapper
    # w2t_ref: (H, C)       second Linear weight, pre-transposed in wrapper
    # o_ref  : (Bt, C, Lp)

    # ---- squeeze: global average pool over the sequence dim (f32 accumulate).
    # Divide by the ORIGINAL L; padded columns are zero so the sum is exact.
    y = jnp.sum(x_ref[...], axis=-1, dtype=jnp.float32) * jnp.float32(inv_l)  # (Bt, C)

    # ---- excite: Linear -> ReLU -> Linear -> Sigmoid (gate computed in f32).
    h = jnp.dot(y.astype(w1t_ref.dtype), w1t_ref[...],
                preferred_element_type=jnp.float32)            # (Bt, H)
    h = jnp.maximum(h, 0.0)
    s = jnp.dot(h.astype(w2t_ref.dtype), w2t_ref[...],
                preferred_element_type=jnp.float32)            # (Bt, C)
    s = jax.nn.sigmoid(s)                                      # (Bt, C) gate

    # ---- scale: broadcast per-channel gate over L, multiply in x's dtype.
    # Re-index x_ref here (don't reuse a long-lived bound value) so the big
    # elementwise op streams directly out of the input VMEM window.
    o_ref[...] = (x_ref[...] * s.astype(o_ref.dtype)[:, :, None]).astype(o_ref.dtype)


def _tpu_geometry():
    """Best-effort (num_tensorcores_per_chip, vmem_capacity_bytes)."""
    kind = ""
    try:
        kind = jax.devices()[0].device_kind.lower()
    except Exception:
        pass
    num_cores = 2 if "v7" in kind else 1
    try:
        vmem_cap = int(pltpu.get_tpu_info().vmem_capacity_bytes)
    except Exception:
        vmem_cap = (64 << 20) if "v7" in kind else (128 << 20)
    return num_cores, vmem_cap


def squeeze_excite(x, w1, w2, *, block_batch=None):
    """x: (B, C, L); w1: (H, C); w2: (C, H)   (PyTorch nn.Linear weight layouts)."""
    B, C, L = x.shape
    H = w1.shape[0]
    assert w1.shape == (H, C) and w2.shape == (C, H)

    # One-time wrapper-side transposes (outside the grid loop) so both matmuls
    # contract last-of-LHS with first-of-RHS inside the kernel.
    w1t = jnp.transpose(w1)            # (C, H)
    w2t = jnp.transpose(w2)            # (H, C)

    itemsize = jnp.dtype(x.dtype).itemsize
    num_cores, vmem_cap = _tpu_geometry()

    # ---- lane-dense padding of the sequence dim (unmasked vst on stores) ----
    Lp = -(-L // 128) * 128

    per_row_bytes = C * Lp * itemsize
    weight_bytes = (C * H + H * C) * jnp.dtype(w1.dtype).itemsize

    # ---- choose how many batch rows per grid step (generation-aware) --------
    if block_batch is None:
        # Budget for one (Bt, C, Lp) slab: ~8 MiB, but cap so the pipeline
        # footprint (2 in + 2 out buffers + weights + slack) stays well inside
        # this chip's VMEM (binding on v7x's 64 MiB).
        max_block = max(1 << 20, (vmem_cap - (8 << 20)) // 4)
        target_block = min(8 << 20, max_block)
        bt = max(1, target_block // per_row_bytes)
        if num_cores >= 2 and B >= 2 * num_cores:
            # v7x megacore: target >= 2 steps per TensorCore (>= 4 total) so the
            # batch axis shards evenly and each core still pipelines.
            min_steps = 2 * num_cores
            bt = min(bt, max(1, B // min_steps))
        block_batch = int(min(bt, B))
    Bt = int(max(1, block_batch))

    # Step count; keep it EVEN on 2-TC chips so the two cores stay balanced.
    steps = -(-B // Bt)
    if num_cores >= 2 and steps > 1 and steps % 2:
        steps += 1
    Bp = steps * Bt

    # Pad batch (zero rows -> zero outputs, sliced off) and sequence dims.
    if (Bp, Lp) != (B, L):
        xp = jnp.pad(x, ((0, Bp - B), (0, 0), (0, Lp - L)))
    else:
        xp = x

    # Explicit scoped-VMEM limit: in+out double-buffered slabs + weights + slack.
    footprint = 4 * Bt * per_row_bytes + 2 * weight_bytes
    vmem_limit = int(min(vmem_cap, max(footprint + (8 << 20), 32 << 20)))

    cost = pl.CostEstimate(
        flops=4 * B * C * H,                                   # two tiny matmuls
        transcendentals=B * C,                                 # sigmoid
        bytes_accessed=2 * B * C * L * itemsize + weight_bytes,
    )

    kernel = functools.partial(_se_kernel, inv_l=1.0 / float(L))

    out = pl.pallas_call(
        kernel,
        out_shape=jax.ShapeDtypeStruct((Bp, C, Lp), x.dtype),
        grid_spec=pltpu.PrefetchScalarGridSpec(
            num_scalar_prefetch=0,
            grid=(Bp // Bt,),
            in_specs=[
                pl.BlockSpec((Bt, C, Lp), lambda b: (b, 0, 0)),
                pl.BlockSpec((C, H), lambda b: (0, 0)),   # constant block -> resident
                pl.BlockSpec((H, C), lambda b: (0, 0)),
            ],
            out_specs=pl.BlockSpec((Bt, C, Lp), lambda b: (b, 0, 0)),
        ),
        compiler_params=pltpu.CompilerParams(
            dimension_semantics=("parallel",),
            vmem_limit_bytes=vmem_limit),
        cost_estimate=cost,
    )(xp, w1t, w2t)

    if (Bp, Lp) != (B, L):
        out = out[:B, :, :L]
    return out
    # TODO(synk): when even a Bt=1 full-L slab exceeds ~40 MiB (v7x) / ~80 MiB
    # (v5e/v6e), switch to a single kernel with a nested emit_pipeline over
    # L-tiles: reduce sweep for the gate, then a scale sweep, keeping the gate
    # resident in VMEM between phases.


def _reference(x, w1, w2):
    y = jnp.mean(x, axis=-1)                     # (B, C)
    h = jnp.maximum(y @ w1.T, 0.0)               # (B, H)
    s = jax.nn.sigmoid(h @ w2.T)                 # (B, C)
    return x * s[:, :, None]


if __name__ == "__main__":
    # SqueezeExciteBlock(ni=64, reduction=16) -> hidden = 64 // 16 = 4
    B, C, L = 8, 64, 256          # L multiple of 128 -> lane-dense stores
    reduction = 16
    H = C // reduction

    key = jax.random.PRNGKey(0)
    kx, k1, k2 = jax.random.split(key, 3)

    x = jax.random.normal(kx, (B, C, L), dtype=jnp.float32)
    # nn.Linear(ni, ni//r, bias=False) / nn.Linear(ni//r, ni, bias=False)
    # weight shapes are (out_features, in_features).
    w1 = jax.random.normal(k1, (H, C), dtype=jnp.float32) * (1.0 / jnp.sqrt(C))
    w2 = jax.random.normal(k2, (C, H), dtype=jnp.float32) * (1.0 / jnp.sqrt(H))

    out = squeeze_excite(x, w1, w2)
    out = jax.block_until_ready(out)

    ref = _reference(x, w1, w2)
    assert out.shape == (B, C, L)
    assert jnp.allclose(out, ref, atol=1e-5, rtol=1e-5), "mismatch vs reference"

    print("KERNEL_OK")
</pallas_src>

<mosaic_0001>
module attributes {stable_mosaic.version = 11 : i64} {
  func.func @_se_kernel(%arg0: i32, %arg1: memref<8x64x256xf32, #tpu.memory_space<vmem>>, %arg2: memref<64x4xf32, #tpu.memory_space<vmem>>, %arg3: memref<4x64xf32, #tpu.memory_space<vmem>>, %arg4: memref<8x64x256xf32, #tpu.memory_space<vmem>>) attributes {dimension_semantics = [#tpu.dimension_semantics<parallel>], iteration_bounds = array<i64: 1>, scalar_prefetch = 0 : i64, scratch_operands = 0 : i64, tpu.core_type = #tpu.core_type<tc>, window_params = [{transform_indices = @transform_0, window_bounds = array<i64: 8, 64, 256>}, {pipeline_mode = #tpu.pipeline_mode<synchronous>, transform_indices = @transform_1, window_bounds = array<i64: 64, 4>}, {pipeline_mode = #tpu.pipeline_mode<synchronous>, transform_indices = @transform_2, window_bounds = array<i64: 4, 64>}, {transform_indices = @transform_3, window_bounds = array<i64: 8, 64, 256>}]} {
    %c0 = arith.constant 0 : index
    %c0_0 = arith.constant 0 : index
    %c0_1 = arith.constant 0 : index
    %0 = vector.load %arg1[%c0, %c0_0, %c0_1] : memref<8x64x256xf32, #tpu.memory_space<vmem>>, vector<8x64x256xf32>
    %cst = arith.constant dense<0.000000e+00> : vector<8x64xf32>
    %1 = vector.multi_reduction <add>, %0, %cst [2] : vector<8x64x256xf32> to vector<8x64xf32>
    %cst_2 = arith.constant 3.906250e-03 : f32
    %2 = vector.broadcast %cst_2 : f32 to vector<8x64xf32>
    %3 = arith.mulf %1, %2 : vector<8x64xf32>
    %c0_3 = arith.constant 0 : index
    %c0_4 = arith.constant 0 : index
    %4 = vector.load %arg2[%c0_3, %c0_4] : memref<64x4xf32, #tpu.memory_space<vmem>>, vector<64x4xf32>
    %cst_5 = arith.constant dense<0.000000e+00> : vector<8x4xf32>
    %5 = tpu.matmul %3, %4, %cst_5 {dimension_numbers = #tpu.dot_dimension_numbers<[1], [0], [0], [1], [0, 0, 1, 1], [], []>} : vector<8x64xf32>, vector<64x4xf32>, vector<8x4xf32> -> vector<8x4xf32>
    %cst_6 = arith.constant 0.000000e+00 : f32
    %6 = vector.broadcast %cst_6 : f32 to vector<8x4xf32>
    %7 = arith.maximumf %5, %6 : vector<8x4xf32>
    %c0_7 = arith.constant 0 : index
    %c0_8 = arith.constant 0 : index
    %8 = vector.load %arg3[%c0_7, %c0_8] : memref<4x64xf32, #tpu.memory_space<vmem>>, vector<4x64xf32>
    %cst_9 = arith.constant dense<0.000000e+00> : vector<8x64xf32>
    %9 = tpu.matmul %7, %8, %cst_9 {dimension_numbers = #tpu.dot_dimension_numbers<[1], [0], [0], [1], [0, 0, 1, 1], [], []>} : vector<8x4xf32>, vector<4x64xf32>, vector<8x64xf32> -> vector<8x64xf32>
    %10 = arith.negf %9 : vector<8x64xf32>
    %11 = math.exp %10 : vector<8x64xf32>
    %cst_10 = arith.constant 1.000000e+00 : f32
    %12 = vector.broadcast %cst_10 : f32 to vector<8x64xf32>
    %13 = arith.addf %12, %11 : vector<8x64xf32>
    %14 = arith.divf %12, %13 : vector<8x64xf32>
    %c0_11 = arith.constant 0 : index
    %c0_12 = arith.constant 0 : index
    %c0_13 = arith.constant 0 : index
    %15 = vector.load %arg1[%c0_11, %c0_12, %c0_13] : memref<8x64x256xf32, #tpu.memory_space<vmem>>, vector<8x64x256xf32>
    %16 = vector.shape_cast %14 : vector<8x64xf32> to vector<8x64x1xf32>
    %17 = vector.broadcast %16 : vector<8x64x1xf32> to vector<8x64x256xf32>
    %18 = arith.mulf %15, %17 : vector<8x64x256xf32>
    %c0_14 = arith.constant 0 : index
    %c0_15 = arith.constant 0 : index
    %c0_16 = arith.constant 0 : index
    %19 = vector.load %arg4[%c0_14, %c0_15, %c0_16] : memref<8x64x256xf32, #tpu.memory_space<vmem>>, vector<8x64x256xf32>
    tpu.vector_store %arg4[%c0_14, %c0_15, %c0_16], %18 {strides = array<i32>} : memref<8x64x256xf32, #tpu.memory_space<vmem>>, vector<8x64x256xf32>,
    return
  }
  func.func @transform_0(%arg0: i32) -> (i32, i32, i32) {
    %c0_i32 = arith.constant 0 : i32
    %c0_i32_0 = arith.constant 0 : i32
    %c0_i32_1 = arith.constant 0 : i32
    return %arg0, %c0_i32, %c0_i32_0 : i32, i32, i32
  }
  func.func @transform_1(%arg0: i32) -> (i32, i32) {
    %c0_i32 = arith.constant 0 : i32
    %c0_i32_0 = arith.constant 0 : i32
    %c0_i32_1 = arith.constant 0 : i32
    return %c0_i32, %c0_i32_0 : i32, i32
  }
  func.func @transform_2(%arg0: i32) -> (i32, i32) {
    %c0_i32 = arith.constant 0 : i32
    %c0_i32_0 = arith.constant 0 : i32
    %c0_i32_1 = arith.constant 0 : i32
    return %c0_i32, %c0_i32_0 : i32, i32
  }
  func.func @transform_3(%arg0: i32) -> (i32, i32, i32) {
    %c0_i32 = arith.constant 0 : i32
    %c0_i32_0 = arith.constant 0 : i32
    %c0_i32_1 = arith.constant 0 : i32
    return %arg0, %c0_i32, %c0_i32_0 : i32, i32, i32
  }
}

</mosaic_0001>

<llo_original>
// kernel: tpu_custom_call.1
$region0: #{tpu_custom_call.1}
  #allocation0 [shape = 'u32[]', space=smem, size = 0x4, offset = 0x4, fixed_abs, tag = 'smem constant byte address 0x4 - core index']
  #allocation1 [shape = 'u32[144,128]{1,0:T(1,128)}', space=vmem, size = 0x12000, scoped, tag = 'internal scratch']
  %s0 = inlined_call_operand.hbm [shape: f32[8,64,256], index: 0, kind: input, shape index: {}]
  %s1 = inlined_call_operand.vmem [shape: f32[64,4], index: 1, kind: input, shape index: {}]
  %s2 = inlined_call_operand.vmem [shape: f32[4,64], index: 2, kind: input, shape index: {}]
  %s3 = inlined_call_operand.hbm [shape: f32[8,64,256], index: 3, kind: output, shape index: {}]
  %s4 = sld [smem:[#allocation0]]
  $region26: #{tpu_custom_call.1} parent=0
    _
  %s6 = ssub.s32 1, %s4
  %s7 = scalar_select 0, %s6, %s4
  $region1: #{tpu_custom_call.1} parent=0
    #allocation2 [shape = 'u8[524288]{0}', space=vmem, size = 0x80000, scoped, tag = 'input window, operand 0, single buffered']
    #allocation3 [shape = 's32[1]{0}', space=sflag, size = 0x4, scoped, tag = 'scoped memory for tpu_custom_call.1']
    #allocation4 [shape = 's32[1]{0}', space=sflag, size = 0x4, scoped, tag = 'scoped memory for tpu_custom_call.1']
    #allocation5 [shape = 'u8[524288]{0}', space=vmem, size = 0x80000, scoped, tag = 'output window, operand 0, single buffered']
    %8 = vsyncpa [#allocation3], 0
    %9 = vsyncpa [#allocation4], 0
    // Predicated region
    $region2: #{tpu_custom_call.1} parent=1 // pred_check
      _
    $region3: #{tpu_custom_call.1} parent=1 // pred_check_branch
      %11 = sbr.rel (0) target = $region5
    $region4: #{tpu_custom_call.1} parent=1 // pred_region
      %s13 = ssub.s32 16384, 16384
      %14 = vsyncadd [#allocation3], %s13
      %s15 = sshll.u32 [#allocation2], 4
      %s16 = int_to_ptr.vmem [resolvable:$true] %s15
      %21 = dma.hbm_to_vmem [thread:$0]  %s0, 16384, %s16, [#allocation3], 256, 256, 16
    $region5: #{tpu_custom_call.1} parent=1 // pred_fallthru
      _
    // Predicated region
    $region6: #{tpu_custom_call.1} parent=1 // pred_check
      _
    $region7: #{tpu_custom_call.1} parent=1 // pred_check_branch
      %23 = sbr.rel (0) target = $region9
    $region8: #{tpu_custom_call.1} parent=1 // pred_region
      _
    $region9: #{tpu_custom_call.1} parent=1 // pred_fallthru
      _
    // Predicated region
    $region10: #{tpu_custom_call.1} parent=1 // pred_check
      _
    $region11: #{tpu_custom_call.1} parent=1 // pred_check_branch
      %25 = sbr.rel (0) target = $region13
    $region12: #{tpu_custom_call.1} parent=1 // pred_region
      _
    $region13: #{tpu_custom_call.1} parent=1 // pred_fallthru
      _
    // Predicated region
    $region14: #{tpu_custom_call.1} parent=1 // pred_check
      _
    $region15: #{tpu_custom_call.1} parent=1 // pred_check_branch
      %27 = sbr.rel (0) target = $region17
    $region16: #{tpu_custom_call.1} parent=1 // pred_region
      %28 = dma.done [#allocation3], 16384
    $region17: #{tpu_custom_call.1} parent=1 // pred_fallthru
      _
    %v29 = vld [vmem:[#allocation2] sm:$0xff]
    %v30 = vld [vmem:[#allocation2 + $0x8] sm:$0xff]
    %v31 = vld [vmem:[#allocation2 + $0x10] sm:$0xff]
    %v32 = vld [vmem:[#allocation2 + $0x18] sm:$0xff]
    %v33 = vld [vmem:[#allocation2 + $0x20] sm:$0xff]
    %v34 = vld [vmem:[#allocation2 + $0x28] sm:$0xff]
    %v35 = vld [vmem:[#allocation2 + $0x30] sm:$0xff]
    %v36 = vld [vmem:[#allocation2 + $0x38] sm:$0xff]
    %v37 = vld [vmem:[#allocation2 + $0x40] sm:$0xff]
    %v38 = vld [vmem:[#allocation2 + $0x48] sm:$0xff]
    %v39 = vld [vmem:[#allocation2 + $0x50] sm:$0xff]
    %v40 = vld [vmem:[#allocation2 + $0x58] sm:$0xff]
    %v41 = vld [vmem:[#allocation2 + $0x60] sm:$0xff]
    %v42 = vld [vmem:[#allocation2 + $0x68] sm:$0xff]
    %v43 = vld [vmem:[#allocation2 + $0x70] sm:$0xff]
    %v44 = vld [vmem:[#allocation2 + $0x78] sm:$0xff]
    %v45 = vld [vmem:[#allocation2 + $0x80] sm:$0xff]
    %v46 = vld [vmem:[#allocation2 + $0x88] sm:$0xff]
    %v47 = vld [vmem:[#allocation2 + $0x90] sm:$0xff]
    %v48 = vld [vmem:[#allocation2 + $0x98] sm:$0xff]
    %v49 = vld [vmem:[#allocation2 + $0xa0] sm:$0xff]
    %v50 = vld [vmem:[#allocation2 + $0xa8] sm:$0xff]
    %v51 = vld [vmem:[#allocation2 + $0xb0] sm:$0xff]
    %v52 = vld [vmem:[#allocation2 + $0xb8] sm:$0xff]
    %v53 = vld [vmem:[#allocation2 + $0xc0] sm:$0xff]
    %v54 = vld [vmem:[#allocation2 + $0xc8] sm:$0xff]
    %v55 = vld [vmem:[#allocation2 + $0xd0] sm:$0xff]
    %v56 = vld [vmem:[#allocation2 + $0xd8] sm:$0xff]
    %v57 = vld [vmem:[#allocation2 + $0xe0] sm:$0xff]
    %v58 = vld [vmem:[#allocation2 + $0xe8] sm:$0xff]
    %v59 = vld [vmem:[#allocation2 + $0xf0] sm:$0xff]
    %v60 = vld [vmem:[#allocation2 + $0xf8] sm:$0xff]
    %v61 = vld [vmem:[#allocation2 + $0x100] sm:$0xff]
    %v62 = vld [vmem:[#allocation2 + $0x108] sm:$0xff]
    %v63 = vld [vmem:[#allocation2 + $0x110] sm:$0xff]
    %v64 = vld [vmem:[#allocation2 + $0x118] sm:$0xff]
    %v65 = vld [vmem:[#allocation2 + $0x120] sm:$0xff]
    %v66 = vld [vmem:[#allocation2 + $0x128] sm:$0xff]
    %v67 = vld [vmem:[#allocation2 + $0x130] sm:$0xff]
    %v68 = vld [vmem:[#allocation2 + $0x138] sm:$0xff]
    %v69 = vld [vmem:[#allocation2 + $0x140] sm:$0xff]
    %v70 = vld [vmem:[#allocation2 + $0x148] sm:$0xff]
    %v71 = vld [vmem:[#allocation2 + $0x150] sm:$0xff]
    %v72 = vld [vmem:[#allocation2 + $0x158] sm:$0xff]
    %v73 = vld [vmem:[#allocation2 + $0x160] sm:$0xff]
    %v74 = vld [vmem:[#allocation2 + $0x168] sm:$0xff]
    %v75 = vld [vmem:[#allocation2 + $0x170] sm:$0xff]
    %v76 = vld [vmem:[#allocation2 + $0x178] sm:$0xff]
    %v77 = vld [vmem:[#allocation2 + $0x180] sm:$0xff]
    %v78 = vld [vmem:[#allocation2 + $0x188] sm:$0xff]
    %v79 = vld [vmem:[#allocation2 + $0x190] sm:$0xff]
    %v80 = vld [vmem:[#allocation2 + $0x198] sm:$0xff]
    %v81 = vld [vmem:[#allocation2 + $0x1a0] sm:$0xff]
    %v82 = vld [vmem:[#allocation2 + $0x1a8] sm:$0xff]
    %v83 = vld [vmem:[#allocation2 + $0x1b0] sm:$0xff]
    %v84 = vld [vmem:[#allocation2 + $0x1b8] sm:$0xff]
    %v85 = vld [vmem:[#allocation2 + $0x1c0] sm:$0xff]
    %v86 = vld [vmem:[#allocation2 + $0x1c8] sm:$0xff]
    %v87 = vld [vmem:[#allocation2 + $0x1d0] sm:$0xff]
    %v88 = vld [vmem:[#allocation2 + $0x1d8] sm:$0xff]
    %v89 = vld [vmem:[#allocation2 + $0x1e0] sm:$0xff]
    %v90 = vld [vmem:[#allocation2 + $0x1e8] sm:$0xff]
    %v91 = vld [vmem:[#allocation2 + $0x1f0] sm:$0xff]
    %v92 = vld [vmem:[#allocation2 + $0x1f8] sm:$0xff]
    %v93 = vld [vmem:[#allocation2 + $0x200] sm:$0xff]
    %v94 = vld [vmem:[#allocation2 + $0x208] sm:$0xff]
    %v95 = vld [vmem:[#allocation2 + $0x210] sm:$0xff]
    %v96 = vld [vmem:[#allocation2 + $0x218] sm:$0xff]
    %v97 = vld [vmem:[#allocation2 + $0x220] sm:$0xff]
    %v98 = vld [vmem:[#allocation2 + $0x228] sm:$0xff]
    %v99 = vld [vmem:[#allocation2 + $0x230] sm:$0xff]
    %v100 = vld [vmem:[#allocation2 + $0x238] sm:$0xff]
    %v101 = vld [vmem:[#allocation2 + $0x240] sm:$0xff]
    %v102 = vld [vmem:[#allocation2 + $0x248] sm:$0xff]
    %v103 = vld [vmem:[#allocation2 + $0x250] sm:$0xff]
    %v104 = vld [vmem:[#allocation2 + $0x258] sm:$0xff]
    %v105 = vld [vmem:[#allocation2 + $0x260] sm:$0xff]
    %v106 = vld [vmem:[#allocation2 + $0x268] sm:$0xff]
    %v107 = vld [vmem:[#allocation2 + $0x270] sm:$0xff]
    %v108 = vld [vmem:[#allocation2 + $0x278] sm:$0xff]
    %v109 = vld [vmem:[#allocation2 + $0x280] sm:$0xff]
    %v110 = vld [vmem:[#allocation2 + $0x288] sm:$0xff]
    %v111 = vld [vmem:[#allocation2 + $0x290] sm:$0xff]
    %v112 = vld [vmem:[#allocation2 + $0x298] sm:$0xff]
    %v113 = vld [vmem:[#allocation2 + $0x2a0] sm:$0xff]
    %v114 = vld [vmem:[#allocation2 + $0x2a8] sm:$0xff]
    %v115 = vld [vmem:[#allocation2 + $0x2b0] sm:$0xff]
    %v116 = vld [vmem:[#allocation2 + $0x2b8] sm:$0xff]
    %v117 = vld [vmem:[#allocation2 + $0x2c0] sm:$0xff]
    %v118 = vld [vmem:[#allocation2 + $0x2c8] sm:$0xff]
    %v119 = vld [vmem:[#allocation2 + $0x2d0] sm:$0xff]
    %v120 = vld [vmem:[#allocation2 + $0x2d8] sm:$0xff]
    %v121 = vld [vmem:[#allocation2 + $0x2e0] sm:$0xff]
    %v122 = vld [vmem:[#allocation2 + $0x2e8] sm:$0xff]
    %v123 = vld [vmem:[#allocation2 + $0x2f0] sm:$0xff]
    %v124 = vld [vmem:[#allocation2 + $0x2f8] sm:$0xff]
    %v125 = vld [vmem:[#allocation2 + $0x300] sm:$0xff]
    %v126 = vld [vmem:[#allocation2 + $0x308] sm:$0xff]
    %v127 = vld [vmem:[#allocation2 + $0x310] sm:$0xff]
    %v128 = vld [vmem:[#allocation2 + $0x318] sm:$0xff]
    %v129 = vld [vmem:[#allocation2 + $0x320] sm:$0xff]
    %v130 = vld [vmem:[#allocation2 + $0x328] sm:$0xff]
    %v131 = vld [vmem:[#allocation2 + $0x330] sm:$0xff]
    %v132 = vld [vmem:[#allocation2 + $0x338] sm:$0xff]
    %v133 = vld [vmem:[#allocation2 + $0x340] sm:$0xff]
    %v134 = vld [vmem:[#allocation2 + $0x348] sm:$0xff]
    %v135 = vld [vmem:[#allocation2 + $0x350] sm:$0xff]
    %v136 = vld [vmem:[#allocation2 + $0x358] sm:$0xff]
    %v137 = vld [vmem:[#allocation2 + $0x360] sm:$0xff]
    %v138 = vld [vmem:[#allocation2 + $0x368] sm:$0xff]
    %v139 = vld [vmem:[#allocation2 + $0x370] sm:$0xff]
    %v140 = vld [vmem:[#allocation2 + $0x378] sm:$0xff]
    %v141 = vld [vmem:[#allocation2 + $0x380] sm:$0xff]
    %v142 = vld [vmem:[#allocation2 + $0x388] sm:$0xff]
    %v143 = vld [vmem:[#allocation2 + $0x390] sm:$0xff]
    %v144 = vld [vmem:[#allocation2 + $0x398] sm:$0xff]
    %v145 = vld [vmem:[#allocation2 + $0x3a0] sm:$0xff]
    %v146 = vld [vmem:[#allocation2 + $0x3a8] sm:$0xff]
    %v147 = vld [vmem:[#allocation2 + $0x3b0] sm:$0xff]
    %v148 = vld [vmem:[#allocation2 + $0x3b8] sm:$0xff]
    %v149 = vld [vmem:[#allocation2 + $0x3c0] sm:$0xff]
    %v150 = vld [vmem:[#allocation2 + $0x3c8] sm:$0xff]
    %v151 = vld [vmem:[#allocation2 + $0x3d0] sm:$0xff]
    %v152 = vld [vmem:[#allocation2 + $0x3d8] sm:$0xff]
    %v153 = vld [vmem:[#allocation2 + $0x3e0] sm:$0xff]
    %v154 = vld [vmem:[#allocation2 + $0x3e8] sm:$0xff]
    %v155 = vld [vmem:[#allocation2 + $0x3f0] sm:$0xff]
    %v156 = vld [vmem:[#allocation2 + $0x3f8] sm:$0xff]
    %v157 = vadd.f32 %v29, %v30
    %158 = vadd.xlane.f32.xlu0 %v157
    %v159 = vpop.xlane.xlu0 %158
    %v160 = vadd.f32 %v31, %v32
    %161 = vadd.xlane.f32.xlu0 %v160
    %v162 = vpop.xlane.xlu0 %161
    %v163 = vadd.f32 %v33, %v34
    %164 = vadd.xlane.f32.xlu0 %v163
    %v165 = vpop.xlane.xlu0 %164
    %v166 = vadd.f32 %v35, %v36
    %167 = vadd.xlane.f32.xlu0 %v166
    %v168 = vpop.xlane.xlu0 %167
    %v169 = vadd.f32 %v37, %v38
    %170 = vadd.xlane.f32.xlu0 %v169
    %v171 = vpop.xlane.xlu0 %170
    %v172 = vadd.f32 %v39, %v40
    %173 = vadd.xlane.f32.xlu0 %v172
    %v174 = vpop.xlane.xlu0 %173
    %v175 = vadd.f32 %v41, %v42
    %176 = vadd.xlane.f32.xlu0 %v175
    %v177 = vpop.xlane.xlu0 %176
    %v178 = vadd.f32 %v43, %v44
    %179 = vadd.xlane.f32.xlu0 %v178
    %v180 = vpop.xlane.xlu0 %179
    %v181 = vadd.f32 %v45, %v46
    %182 = vadd.xlane.f32.xlu0 %v181
    %v183 = vpop.xlane.xlu0 %182
    %v184 = vadd.f32 %v47, %v48
    %185 = vadd.xlane.f32.xlu0 %v184
    %v186 = vpop.xlane.xlu0 %185
    %v187 = vadd.f32 %v49, %v50
    %188 = vadd.xlane.f32.xlu0 %v187
    %v189 = vpop.xlane.xlu0 %188
    %v190 = vadd.f32 %v51, %v52
    %191 = vadd.xlane.f32.xlu0 %v190
    %v192 = vpop.xlane.xlu0 %191
    %v193 = vadd.f32 %v53, %v54
    %194 = vadd.xlane.f32.xlu0 %v193
    %v195 = vpop.xlane.xlu0 %194
    %v196 = vadd.f32 %v55, %v56
    %197 = vadd.xlane.f32.xlu0 %v196
    %v198 = vpop.xlane.xlu0 %197
    %v199 = vadd.f32 %v57, %v58
    %200 = vadd.xlane.f32.xlu0 %v199
    %v201 = vpop.xlane.xlu0 %200
    %v202 = vadd.f32 %v59, %v60
    %203 = vadd.xlane.f32.xlu0 %v202
    %v204 = vpop.xlane.xlu0 %203
    %v205 = vadd.f32 %v61, %v62
    %206 = vadd.xlane.f32.xlu0 %v205
    %v207 = vpop.xlane.xlu0 %206
    %v208 = vadd.f32 %v63, %v64
    %209 = vadd.xlane.f32.xlu0 %v208
    %v210 = vpop.xlane.xlu0 %209
    %v211 = vadd.f32 %v65, %v66
    %212 = vadd.xlane.f32.xlu0 %v211
    %v213 = vpop.xlane.xlu0 %212
    %v214 = vadd.f32 %v67, %v68
    %215 = vadd.xlane.f32.xlu0 %v214
    %v216 = vpop.xlane.xlu0 %215
    %v217 = vadd.f32 %v69, %v70
    %218 = vadd.xlane.f32.xlu0 %v217
    %v219 = vpop.xlane.xlu0 %218
    %v220 = vadd.f32 %v71, %v72
    %221 = vadd.xlane.f32.xlu0 %v220
    %v222 = vpop.xlane.xlu0 %221
    %v223 = vadd.f32 %v73, %v74
    %224 = vadd.xlane.f32.xlu0 %v223
    %v225 = vpop.xlane.xlu0 %224
    %v226 = vadd.f32 %v75, %v76
    %227 = vadd.xlane.f32.xlu0 %v226
    %v228 = vpop.xlane.xlu0 %227
    %v229 = vadd.f32 %v77, %v78
    %230 = vadd.xlane.f32.xlu0 %v229
    %v231 = vpop.xlane.xlu0 %230
    %v232 = vadd.f32 %v79, %v80
    %233 = vadd.xlane.f32.xlu0 %v232
    %v234 = vpop.xlane.xlu0 %233
    %v235 = vadd.f32 %v81, %v82
    %236 = vadd.xlane.f32.xlu0 %v235
    %v237 = vpop.xlane.xlu0 %236
    %v238 = vadd.f32 %v83, %v84
    %239 = vadd.xlane.f32.xlu0 %v238
    %v240 = vpop.xlane.xlu0 %239
    %v241 = vadd.f32 %v85, %v86
    %242 = vadd.xlane.f32.xlu0 %v241
    %v243 = vpop.xlane.xlu0 %242
    %v244 = vadd.f32 %v87, %v88
    %245 = vadd.xlane.f32.xlu0 %v244
    %v246 = vpop.xlane.xlu0 %245
    %v247 = vadd.f32 %v89, %v90
    %248 = vadd.xlane.f32.xlu0 %v247
    %v249 = vpop.xlane.xlu0 %248
    %v250 = vadd.f32 %v91, %v92
    %251 = vadd.xlane.f32.xlu0 %v250
    %v252 = vpop.xlane.xlu0 %251
    %v253 = vadd.f32 %v93, %v94
    %254 = vadd.xlane.f32.xlu0 %v253
    %v255 = vpop.xlane.xlu0 %254
    %v256 = vadd.f32 %v95, %v96
    %257 = vadd.xlane.f32.xlu0 %v256
    %v258 = vpop.xlane.xlu0 %257
    %v259 = vadd.f32 %v97, %v98
    %260 = vadd.xlane.f32.xlu0 %v259
    %v261 = vpop.xlane.xlu0 %260
    %v262 = vadd.f32 %v99, %v100
    %263 = vadd.xlane.f32.xlu0 %v262
    %v264 = vpop.xlane.xlu0 %263
    %v265 = vadd.f32 %v101, %v102
    %266 = vadd.xlane.f32.xlu0 %v265
    %v267 = vpop.xlane.xlu0 %266
    %v268 = vadd.f32 %v103, %v104
    %269 = vadd.xlane.f32.xlu0 %v268
    %v270 = vpop.xlane.xlu0 %269
    %v271 = vadd.f32 %v105, %v106
    %272 = vadd.xlane.f32.xlu0 %v271
    %v273 = vpop.xlane.xlu0 %272
    %v274 = vadd.f32 %v107, %v108
    %275 = vadd.xlane.f32.xlu0 %v274
    %v276 = vpop.xlane.xlu0 %275
    %v277 = vadd.f32 %v109, %v110
    %278 = vadd.xlane.f32.xlu0 %v277
    %v279 = vpop.xlane.xlu0 %278
    %v280 = vadd.f32 %v111, %v112
    %281 = vadd.xlane.f32.xlu0 %v280
    %v282 = vpop.xlane.xlu0 %281
    %v283 = vadd.f32 %v113, %v114
    %284 = vadd.xlane.f32.xlu0 %v283
    %v285 = vpop.xlane.xlu0 %284
    %v286 = vadd.f32 %v115, %v116
    %287 = vadd.xlane.f32.xlu0 %v286
    %v288 = vpop.xlane.xlu0 %287
    %v289 = vadd.f32 %v117, %v118
    %290 = vadd.xlane.f32.xlu0 %v289
    %v291 = vpop.xlane.xlu0 %290
    %v292 = vadd.f32 %v119, %v120
    %293 = vadd.xlane.f32.xlu0 %v292
    %v294 = vpop.xlane.xlu0 %293
    %v295 = vadd.f32 %v121, %v122
    %296 = vadd.xlane.f32.xlu0 %v295
    %v297 = vpop.xlane.xlu0 %296
    %v298 = vadd.f32 %v123, %v124
    %299 = vadd.xlane.f32.xlu0 %v298
    %v300 = vpop.xlane.xlu0 %299
    %v301 = vadd.f32 %v125, %v126
    %302 = vadd.xlane.f32.xlu0 %v301
    %v303 = vpop.xlane.xlu0 %302
    %v304 = vadd.f32 %v127, %v128
    %305 = vadd.xlane.f32.xlu0 %v304
    %v306 = vpop.xlane.xlu0 %305
    %v307 = vadd.f32 %v129, %v130
    %308 = vadd.xlane.f32.xlu0 %v307
    %v309 = vpop.xlane.xlu0 %308
    %v310 = vadd.f32 %v131, %v132
    %311 = vadd.xlane.f32.xlu0 %v310
    %v312 = vpop.xlane.xlu0 %311
    %v313 = vadd.f32 %v133, %v134
    %314 = vadd.xlane.f32.xlu0 %v313
    %v315 = vpop.xlane.xlu0 %314
    %v316 = vadd.f32 %v135, %v136
    %317 = vadd.xlane.f32.xlu0 %v316
    %v318 = vpop.xlane.xlu0 %317
    %v319 = vadd.f32 %v137, %v138
    %320 = vadd.xlane.f32.xlu0 %v319
    %v321 = vpop.xlane.xlu0 %320
    %v322 = vadd.f32 %v139, %v140
    %323 = vadd.xlane.f32.xlu0 %v322
    %v324 = vpop.xlane.xlu0 %323
    %v325 = vadd.f32 %v141, %v142
    %326 = vadd.xlane.f32.xlu0 %v325
    %v327 = vpop.xlane.xlu0 %326
    %v328 = vadd.f32 %v143, %v144
    %329 = vadd.xlane.f32.xlu0 %v328
    %v330 = vpop.xlane.xlu0 %329
    %v331 = vadd.f32 %v145, %v146
    %332 = vadd.xlane.f32.xlu0 %v331
    %v333 = vpop.xlane.xlu0 %332
    %v334 = vadd.f32 %v147, %v148
    %335 = vadd.xlane.f32.xlu0 %v334
    %v336 = vpop.xlane.xlu0 %335
    %v337 = vadd.f32 %v149, %v150
    %338 = vadd.xlane.f32.xlu0 %v337
    %v339 = vpop.xlane.xlu0 %338
    %v340 = vadd.f32 %v151, %v152
    %341 = vadd.xlane.f32.xlu0 %v340
    %v342 = vpop.xlane.xlu0 %341
    %v343 = vadd.f32 %v153, %v154
    %344 = vadd.xlane.f32.xlu0 %v343
    %v345 = vpop.xlane.xlu0 %344
    %v346 = vadd.f32 %v155, %v156
    %347 = vadd.xlane.f32.xlu0 %v346
    %v348 = vpop.xlane.xlu0 %347
    %v349 = vmul.f32 %v159, 0.00390625
    %v350 = vmul.f32 %v162, 0.00390625
    %v351 = vmul.f32 %v165, 0.00390625
    %v352 = vmul.f32 %v168, 0.00390625
    %v353 = vmul.f32 %v171, 0.00390625
    %v354 = vmul.f32 %v174, 0.00390625
    %v355 = vmul.f32 %v177, 0.00390625
    %v356 = vmul.f32 %v180, 0.00390625
    %v357 = vmul.f32 %v183, 0.00390625
    %v358 = vmul.f32 %v186, 0.00390625
    %v359 = vmul.f32 %v189, 0.00390625
    %v360 = vmul.f32 %v192, 0.00390625
    %v361 = vmul.f32 %v195, 0.00390625
    %v362 = vmul.f32 %v198, 0.00390625
    %v363 = vmul.f32 %v201, 0.00390625
    %v364 = vmul.f32 %v204, 0.00390625
    %v365 = vmul.f32 %v207, 0.00390625
    %v366 = vmul.f32 %v210, 0.00390625
    %v367 = vmul.f32 %v213, 0.00390625
    %v368 = vmul.f32 %v216, 0.00390625
    %v369 = vmul.f32 %v219, 0.00390625
    %v370 = vmul.f32 %v222, 0.00390625
    %v371 = vmul.f32 %v225, 0.00390625
    %v372 = vmul.f32 %v228, 0.00390625
    %v373 = vmul.f32 %v231, 0.00390625
    %v374 = vmul.f32 %v234, 0.00390625
    %v375 = vmul.f32 %v237, 0.00390625
    %v376 = vmul.f32 %v240, 0.00390625
    %v377 = vmul.f32 %v243, 0.00390625
    %v378 = vmul.f32 %v246, 0.00390625
    %v379 = vmul.f32 %v249, 0.00390625
    %v380 = vmul.f32 %v252, 0.00390625
    %v381 = vmul.f32 %v255, 0.00390625
    %v382 = vmul.f32 %v258, 0.00390625
    %v383 = vmul.f32 %v261, 0.00390625
    %v384 = vmul.f32 %v264, 0.00390625
    %v385 = vmul.f32 %v267, 0.00390625
    %v386 = vmul.f32 %v270, 0.00390625
    %v387 = vmul.f32 %v273, 0.00390625
    %v388 = vmul.f32 %v276, 0.00390625
    %v389 = vmul.f32 %v279, 0.00390625
    %v390 = vmul.f32 %v282, 0.00390625
    %v391 = vmul.f32 %v285, 0.00390625
    %v392 = vmul.f32 %v288, 0.00390625
    %v393 = vmul.f32 %v291, 0.00390625
    %v394 = vmul.f32 %v294, 0.00390625
    %v395 = vmul.f32 %v297, 0.00390625
    %v396 = vmul.f32 %v300, 0.00390625
    %v397 = vmul.f32 %v303, 0.00390625
    %v398 = vmul.f32 %v306, 0.00390625
    %v399 = vmul.f32 %v309, 0.00390625
    %v400 = vmul.f32 %v312, 0.00390625
    %v401 = vmul.f32 %v315, 0.00390625
    %v402 = vmul.f32 %v318, 0.00390625
    %v403 = vmul.f32 %v321, 0.00390625
    %v404 = vmul.f32 %v324, 0.00390625
    %v405 = vmul.f32 %v327, 0.00390625
    %v406 = vmul.f32 %v330, 0.00390625
    %v407 = vmul.f32 %v333, 0.00390625
    %v408 = vmul.f32 %v336, 0.00390625
    %v409 = vmul.f32 %v339, 0.00390625
    %v410 = vmul.f32 %v342, 0.00390625
    %v411 = vmul.f32 %v345, 0.00390625
    %v412 = vmul.f32 %v348, 0.00390625
    %v413 = vld [vmem:[%s1] sm:$0xff]
    %v414 = vld [vmem:[%s1 + $0x8] sm:$0xff]
    %v415 = vld [vmem:[%s1 + $0x10] sm:$0xff]
    %v416 = vld [vmem:[%s1 + $0x18] sm:$0xff]
    %v417 = vld [vmem:[%s1 + $0x20] sm:$0xff]
    %v418 = vld [vmem:[%s1 + $0x28] sm:$0xff]
    %v419 = vld [vmem:[%s1 + $0x30] sm:$0xff]
    %v420 = vld [vmem:[%s1 + $0x38] sm:$0xff]
    %v485 = vlaneseq
    %v486 = vand.u32 %v485, 127
    %v487 = vlaneseq
    %v488 = vshrl.u32 %v487, 7
    %v489 = vsub.s32 %v486, %v488
    %v490 = vrot.slane %v349, %v489
    %v491 = vadd.s32 %v486, 4294967288
    %v492 = vlaneseq
    %v493 = vshrl.u32 %v492, 7
    %v494 = vsub.s32 %v491, %v493
    %v495 = vrot.slane %v350, %v494
    %vm496 = vcmask 130112
    %v497 = vsel %vm496, %v495, %v490
    %v498 = vadd.s32 %v486, 4294967280
    %v499 = vlaneseq
    %v500 = vshrl.u32 %v499, 7
    %v501 = vsub.s32 %v498, %v500
    %v502 = vrot.slane %v351, %v501
    %vm503 = vcmask 195712
    %v504 = vsel %vm503, %v502, %v497
    %v505 = vadd.s32 %v486, 4294967272
    %v506 = vlaneseq
    %v507 = vshrl.u32 %v506, 7
    %v508 = vsub.s32 %v505, %v507
    %v509 = vrot.slane %v352, %v508
    %vm510 = vcmask 261312
    %v511 = vsel %vm510, %v509, %v504
    %v512 = vadd.s32 %v486, 4294967264
    %v513 = vlaneseq
    %v514 = vshrl.u32 %v513, 7
    %v515 = vsub.s32 %v512, %v514
    %v516 = vrot.slane %v353, %v515
    %vm517 = vcmask 326912
    %v518 = vsel %vm517, %v516, %v511
    %v519 = vadd.s32 %v486, 4294967256
    %v520 = vlaneseq
    %v521 = vshrl.u32 %v520, 7
    %v522 = vsub.s32 %v519, %v521
    %v523 = vrot.slane %v354, %v522
    %vm524 = vcmask 392512
    %v525 = vsel %vm524, %v523, %v518
    %v526 = vadd.s32 %v486, 4294967248
    %v527 = vlaneseq
    %v528 = vshrl.u32 %v527, 7
    %v529 = vsub.s32 %v526, %v528
    %v530 = vrot.slane %v355, %v529
    %vm531 = vcmask 458112
    %v532 = vsel %vm531, %v530, %v525
    %v533 = vadd.s32 %v486, 4294967240
    %v534 = vlaneseq
    %v535 = vshrl.u32 %v534, 7
    %v536 = vsub.s32 %v533, %v535
    %v537 = vrot.slane %v356, %v536
    %vm538 = vcmask 523712
    %v539 = vsel %vm538, %v537, %v532
    %v540 = vlaneseq
    %v541 = vshrl.u32 %v540, 7
    %v542 = vsub.s32 %v486, %v541
    %v543 = vrot.slane %v357, %v542
    %v544 = vlaneseq
    %v545 = vshrl.u32 %v544, 7
    %v546 = vsub.s32 %v491, %v545
    %v547 = vrot.slane %v358, %v546
    %v548 = vsel %vm496, %v547, %v543
    %v549 = vlaneseq
    %v550 = vshrl.u32 %v549, 7
    %v551 = vsub.s32 %v498, %v550
    %v552 = vrot.slane %v359, %v551
    %v553 = vsel %vm503, %v552, %v548
    %v554 = vlaneseq
    %v555 = vshrl.u32 %v554, 7
    %v556 = vsub.s32 %v505, %v555
    %v557 = vrot.slane %v360, %v556
    %v558 = vsel %vm510, %v557, %v553
    %v559 = vlaneseq
    %v560 = vshrl.u32 %v559, 7
    %v561 = vsub.s32 %v512, %v560
    %v562 = vrot.slane %v361, %v561
    %v563 = vsel %vm517, %v562, %v558
    %v564 = vlaneseq
    %v565 = vshrl.u32 %v564, 7
    %v566 = vsub.s32 %v519, %v565
    %v567 = vrot.slane %v362, %v566
    %v568 = vsel %vm524, %v567, %v563
    %v569 = vlaneseq
    %v570 = vshrl.u32 %v569, 7
    %v571 = vsub.s32 %v526, %v570
    %v572 = vrot.slane %v363, %v571
    %v573 = vsel %vm531, %v572, %v568
    %v574 = vlaneseq
    %v575 = vshrl.u32 %v574, 7
    %v576 = vsub.s32 %v533, %v575
    %v577 = vrot.slane %v364, %v576
    %v578 = vsel %vm538, %v577, %v573
    %v579 = vlaneseq
    %v580 = vshrl.u32 %v579, 7
    %v581 = vsub.s32 %v486, %v580
    %v582 = vrot.slane %v365, %v581
    %v583 = vlaneseq
    %v584 = vshrl.u32 %v583, 7
    %v585 = vsub.s32 %v491, %v584
    %v586 = vrot.slane %v366, %v585
    %v587 = vsel %vm496, %v586, %v582
    %v588 = vlaneseq
    %v589 = vshrl.u32 %v588, 7
    %v590 = vsub.s32 %v498, %v589
    %v591 = vrot.slane %v367, %v590
    %v592 = vsel %vm503, %v591, %v587
    %v593 = vlaneseq
    %v594 = vshrl.u32 %v593, 7
    %v595 = vsub.s32 %v505, %v594
    %v596 = vrot.slane %v368, %v595
    %v597 = vsel %vm510, %v596, %v592
    %v598 = vlaneseq
    %v599 = vshrl.u32 %v598, 7
    %v600 = vsub.s32 %v512, %v599
    %v601 = vrot.slane %v369, %v600
    %v602 = vsel %vm517, %v601, %v597
    %v603 = vlaneseq
    %v604 = vshrl.u32 %v603, 7
    %v605 = vsub.s32 %v519, %v604
    %v606 = vrot.slane %v370, %v605
    %v607 = vsel %vm524, %v606, %v602
    %v608 = vlaneseq
    %v609 = vshrl.u32 %v608, 7
    %v610 = vsub.s32 %v526, %v609
    %v611 = vrot.slane %v371, %v610
    %v612 = vsel %vm531, %v611, %v607
    %v613 = vlaneseq
    %v614 = vshrl.u32 %v613, 7
    %v615 = vsub.s32 %v533, %v614
    %v616 = vrot.slane %v372, %v615
    %v617 = vsel %vm538, %v616, %v612
    %v618 = vlaneseq
    %v619 = vshrl.u32 %v618, 7
    %v620 = vsub.s32 %v486, %v619
    %v621 = vrot.slane %v373, %v620
    %v622 = vlaneseq
    %v623 = vshrl.u32 %v622, 7
    %v624 = vsub.s32 %v491, %v623
    %v625 = vrot.slane %v374, %v624
    %v626 = vsel %vm496, %v625, %v621
    %v627 = vlaneseq
    %v628 = vshrl.u32 %v627, 7
    %v629 = vsub.s32 %v498, %v628
    %v630 = vrot.slane %v375, %v629
    %v631 = vsel %vm503, %v630, %v626
    %v632 = vlaneseq
    %v633 = vshrl.u32 %v632, 7
    %v634 = vsub.s32 %v505, %v633
    %v635 = vrot.slane %v376, %v634
    %v636 = vsel %vm510, %v635, %v631
    %v637 = vlaneseq
    %v638 = vshrl.u32 %v637, 7
    %v639 = vsub.s32 %v512, %v638
    %v640 = vrot.slane %v377, %v639
    %v641 = vsel %vm517, %v640, %v636
    %v642 = vlaneseq
    %v643 = vshrl.u32 %v642, 7
    %v644 = vsub.s32 %v519, %v643
    %v645 = vrot.slane %v378, %v644
    %v646 = vsel %vm524, %v645, %v641
    %v647 = vlaneseq
    %v648 = vshrl.u32 %v647, 7
    %v649 = vsub.s32 %v526, %v648
    %v650 = vrot.slane %v379, %v649
    %v651 = vsel %vm531, %v650, %v646
    %v652 = vlaneseq
    %v653 = vshrl.u32 %v652, 7
    %v654 = vsub.s32 %v533, %v653
    %v655 = vrot.slane %v380, %v654
    %v656 = vsel %vm538, %v655, %v651
    %v657 = vlaneseq
    %v658 = vshrl.u32 %v657, 7
    %v659 = vsub.s32 %v486, %v658
    %v660 = vrot.slane %v381, %v659
    %v661 = vlaneseq
    %v662 = vshrl.u32 %v661, 7
    %v663 = vsub.s32 %v491, %v662
    %v664 = vrot.slane %v382, %v663
    %v665 = vsel %vm496, %v664, %v660
    %v666 = vlaneseq
    %v667 = vshrl.u32 %v666, 7
    %v668 = vsub.s32 %v498, %v667
    %v669 = vrot.slane %v383, %v668
    %v670 = vsel %vm503, %v669, %v665
    %v671 = vlaneseq
    %v672 = vshrl.u32 %v671, 7
    %v673 = vsub.s32 %v505, %v672
    %v674 = vrot.slane %v384, %v673
    %v675 = vsel %vm510, %v674, %v670
    %v676 = vlaneseq
    %v677 = vshrl.u32 %v676, 7
    %v678 = vsub.s32 %v512, %v677
    %v679 = vrot.slane %v385, %v678
    %v680 = vsel %vm517, %v679, %v675
    %v681 = vlaneseq
    %v682 = vshrl.u32 %v681, 7
    %v683 = vsub.s32 %v519, %v682
    %v684 = vrot.slane %v386, %v683
    %v685 = vsel %vm524, %v684, %v680
    %v686 = vlaneseq
    %v687 = vshrl.u32 %v686, 7
    %v688 = vsub.s32 %v526, %v687
    %v689 = vrot.slane %v387, %v688
    %v690 = vsel %vm531, %v689, %v685
    %v691 = vlaneseq
    %v692 = vshrl.u32 %v691, 7
    %v693 = vsub.s32 %v533, %v692
    %v694 = vrot.slane %v388, %v693
    %v695 = vsel %vm538, %v694, %v690
    %v696 = vlaneseq
    %v697 = vshrl.u32 %v696, 7
    %v698 = vsub.s32 %v486, %v697
    %v699 = vrot.slane %v389, %v698
    %v700 = vlaneseq
    %v701 = vshrl.u32 %v700, 7
    %v702 = vsub.s32 %v491, %v701
    %v703 = vrot.slane %v390, %v702
    %v704 = vsel %vm496, %v703, %v699
    %v705 = vlaneseq
    %v706 = vshrl.u32 %v705, 7
    %v707 = vsub.s32 %v498, %v706
    %v708 = vrot.slane %v391, %v707
    %v709 = vsel %vm503, %v708, %v704
    %v710 = vlaneseq
    %v711 = vshrl.u32 %v710, 7
    %v712 = vsub.s32 %v505, %v711
    %v713 = vrot.slane %v392, %v712
    %v714 = vsel %vm510, %v713, %v709
    %v715 = vlaneseq
    %v716 = vshrl.u32 %v715, 7
    %v717 = vsub.s32 %v512, %v716
    %v718 = vrot.slane %v393, %v717
    %v719 = vsel %vm517, %v718, %v714
    %v720 = vlaneseq
    %v721 = vshrl.u32 %v720, 7
    %v722 = vsub.s32 %v519, %v721
    %v723 = vrot.slane %v394, %v722
    %v724 = vsel %vm524, %v723, %v719
    %v725 = vlaneseq
    %v726 = vshrl.u32 %v725, 7
    %v727 = vsub.s32 %v526, %v726
    %v728 = vrot.slane %v395, %v727
    %v729 = vsel %vm531, %v728, %v724
    %v730 = vlaneseq
    %v731 = vshrl.u32 %v730, 7
    %v732 = vsub.s32 %v533, %v731
    %v733 = vrot.slane %v396, %v732
    %v734 = vsel %vm538, %v733, %v729
    %v735 = vlaneseq
    %v736 = vshrl.u32 %v735, 7
    %v737 = vsub.s32 %v486, %v736
    %v738 = vrot.slane %v397, %v737
    %v739 = vlaneseq
    %v740 = vshrl.u32 %v739, 7
    %v741 = vsub.s32 %v491, %v740
    %v742 = vrot.slane %v398, %v741
    %v743 = vsel %vm496, %v742, %v738
    %v744 = vlaneseq
    %v745 = vshrl.u32 %v744, 7
    %v746 = vsub.s32 %v498, %v745
    %v747 = vrot.slane %v399, %v746
    %v748 = vsel %vm503, %v747, %v743
    %v749 = vlaneseq
    %v750 = vshrl.u32 %v749, 7
    %v751 = vsub.s32 %v505, %v750
    %v752 = vrot.slane %v400, %v751
    %v753 = vsel %vm510, %v752, %v748
    %v754 = vlaneseq
    %v755 = vshrl.u32 %v754, 7
    %v756 = vsub.s32 %v512, %v755
    %v757 = vrot.slane %v401, %v756
    %v758 = vsel %vm517, %v757, %v753
    %v759 = vlaneseq
    %v760 = vshrl.u32 %v759, 7
    %v761 = vsub.s32 %v519, %v760
    %v762 = vrot.slane %v402, %v761
    %v763 = vsel %vm524, %v762, %v758
    %v764 = vlaneseq
    %v765 = vshrl.u32 %v764, 7
    %v766 = vsub.s32 %v526, %v765
    %v767 = vrot.slane %v403, %v766
    %v768 = vsel %vm531, %v767, %v763
    %v769 = vlaneseq
    %v770 = vshrl.u32 %v769, 7
    %v771 = vsub.s32 %v533, %v770
    %v772 = vrot.slane %v404, %v771
    %v773 = vsel %vm538, %v772, %v768
    %v774 = vlaneseq
    %v775 = vshrl.u32 %v774, 7
    %v776 = vsub.s32 %v486, %v775
    %v777 = vrot.slane %v405, %v776
    %v778 = vlaneseq
    %v779 = vshrl.u32 %v778, 7
    %v780 = vsub.s32 %v491, %v779
    %v781 = vrot.slane %v406, %v780
    %v782 = vsel %vm496, %v781, %v777
    %v783 = vlaneseq
    %v784 = vshrl.u32 %v783, 7
    %v785 = vsub.s32 %v498, %v784
    %v786 = vrot.slane %v407, %v785
    %v787 = vsel %vm503, %v786, %v782
    %v788 = vlaneseq
    %v789 = vshrl.u32 %v788, 7
    %v790 = vsub.s32 %v505, %v789
    %v791 = vrot.slane %v408, %v790
    %v792 = vsel %vm510, %v791, %v787
    %v793 = vlaneseq
    %v794 = vshrl.u32 %v793, 7
    %v795 = vsub.s32 %v512, %v794
    %v796 = vrot.slane %v409, %v795
    %v797 = vsel %vm517, %v796, %v792
    %v798 = vlaneseq
    %v799 = vshrl.u32 %v798, 7
    %v800 = vsub.s32 %v519, %v799
    %v801 = vrot.slane %v410, %v800
    %v802 = vsel %vm524, %v801, %v797
    %v803 = vlaneseq
    %v804 = vshrl.u32 %v803, 7
    %v805 = vsub.s32 %v526, %v804
    %v806 = vrot.slane %v411, %v805
    %v807 = vsel %vm531, %v806, %v802
    %v808 = vlaneseq
    %v809 = vshrl.u32 %v808, 7
    %v810 = vsub.s32 %v533, %v809
    %v811 = vrot.slane %v412, %v810
    %v812 = vsel %vm538, %v811, %v807
    %vm813 = vcmask 1041409
    %v814 = vsel %vm813, %v578, %v539
    %vm815 = vcmask 1042434
    %v816 = vsel %vm815, %v617, %v814
    %vm817 = vcmask 1043459
    %v818 = vsel %vm817, %v656, %v816
    %vm819 = vcmask 1044484
    %v820 = vsel %vm819, %v695, %v818
    %vm821 = vcmask 1045509
    %v822 = vsel %vm821, %v734, %v820
    %vm823 = vcmask 1046534
    %v824 = vsel %vm823, %v773, %v822
    %vm825 = vcmask 1047559
    %v826 = vsel %vm825, %v812, %v824
    %vm827 = vcmask 523264
    %v828 = vsel %vm827, %v826, 0
    %830 = vmatprep.subr.mxu0 0.0
    %831 = vmatpush1.msra.mxu0 0.0
    %832 = vmatprep.subr.mxu0 0.0
    %833 = vmatpush1.msra.mxu0 0.0
    %834 = vmatprep.subr.mxu0 0.0
    %835 = vmatpush1.msra.mxu0 0.0
    %836 = vmatprep.subr.mxu0 0.0
    %837 = vmatpush1.msra.mxu0 0.0
    %838 = vmatprep.subr.mxu0 0.0
    %839 = vmatpush1.msra.mxu0 0.0
    %840 = vmatprep.subr.mxu0 0.0
    %841 = vmatpush1.msra.mxu0 0.0
    %842 = vmatprep.subr.mxu0 0.0
    %843 = vmatpush1.msra.mxu0 0.0
    %844 = vmatprep.subr.mxu0 0.0
    %845 = vmatpush1.msra.mxu0 0.0
    %846 = vmatprep.subr.mxu0 0.0
    %847 = vmatpush1.msra.mxu0 %v420
    %848 = vmatprep.subr.mxu0 0.0
    %849 = vmatpush1.msra.mxu0 %v419
    %850 = vmatprep.subr.mxu0 0.0
    %851 = vmatpush1.msra.mxu0 %v418
    %852 = vmatprep.subr.mxu0 0.0
    %853 = vmatpush1.msra.mxu0 %v417
    %854 = vmatprep.subr.mxu0 0.0
    %855 = vmatpush1.msra.mxu0 %v416
    %856 = vmatprep.subr.mxu0 0.0
    %857 = vmatpush1.msra.mxu0 %v415
    %858 = vmatprep.subr.mxu0 0.0
    %859 = vmatpush1.msra.mxu0 %v414
    %860 = vmatprep.subr.mxu0 0.0
    %861 = vmatpush1.msra.mxu0 %v413
    %862 = vmatprep.subr.mxu0 0.0
    %863 = vmatpush2.msra.mxu0 0.0
    %864 = vmatprep.subr.mxu0 0.0
    %865 = vmatpush2.msra.mxu0 0.0
    %866 = vmatprep.subr.mxu0 0.0
    %867 = vmatpush2.msra.mxu0 0.0
    %868 = vmatprep.subr.mxu0 0.0
    %869 = vmatpush2.msra.mxu0 0.0
    %870 = vmatprep.subr.mxu0 0.0
    %871 = vmatpush2.msra.mxu0 0.0
    %872 = vmatprep.subr.mxu0 0.0
    %873 = vmatpush2.msra.mxu0 0.0
    %874 = vmatprep.subr.mxu0 0.0
    %875 = vmatpush2.msra.mxu0 0.0
    %876 = vmatprep.subr.mxu0 0.0
    %877 = vmatpush2.msra.mxu0 0.0
    %878 = vmatprep.subr.mxu0 0.0
    %879 = vmatpush2.msra.mxu0 0.0
    %880 = vmatprep.subr.mxu0 0.0
    %881 = vmatpush2.msra.mxu0 0.0
    %882 = vmatprep.subr.mxu0 0.0
    %883 = vmatpush2.msra.mxu0 0.0
    %884 = vmatprep.subr.mxu0 0.0
    %885 = vmatpush2.msra.mxu0 0.0
    %886 = vmatprep.subr.mxu0 0.0
    %887 = vmatpush2.msra.mxu0 0.0
    %888 = vmatprep.subr.mxu0 0.0
    %889 = vmatpush2.msra.mxu0 0.0
    %890 = vmatprep.subr.mxu0 0.0
    %891 = vmatpush2.msra.mxu0 0.0
    %892 = vmatprep.subr.mxu0 0.0
    %893 = vmatpush2.msra.mxu0 0.0
    %894 = vmatprep.mubr.f32.mxu0 0.0
    %895 = vmatmul.mubr.f32.gmra.mxu0 %v828
    %v896 = vpop.f32.mrf.mxu0
    %v897 = vadd.f32 0.0, %v896
    %v898 = vpop.f32.mrf.mxu0
    %899 = vdwg.mxu0
    %v900 = vmax.f32 %v897, 0.0
    %v901 = vld [vmem:[%s2] sm:$0xf]
    %vm902 = vcmask 31744
    %v904 = vsel %vm902, %v900, 0
    %vm906 = vcmask 1043456
    %v908 = vsel %vm906, %v901, 0
    %910 = vmatprep.subr.mxu0 0.0
    %911 = vmatpush1.msra.mxu0 0.0
    %912 = vmatprep.subr.mxu0 0.0
    %913 = vmatpush1.msra.mxu0 0.0
    %914 = vmatprep.subr.mxu0 0.0
    %915 = vmatpush1.msra.mxu0 0.0
    %916 = vmatprep.subr.mxu0 0.0
    %917 = vmatpush1.msra.mxu0 0.0
    %918 = vmatprep.subr.mxu0 0.0
    %919 = vmatpush1.msra.mxu0 0.0
    %920 = vmatprep.subr.mxu0 0.0
    %921 = vmatpush1.msra.mxu0 0.0
    %922 = vmatprep.subr.mxu0 0.0
    %923 = vmatpush1.msra.mxu0 0.0
    %924 = vmatprep.subr.mxu0 0.0
    %925 = vmatpush1.msra.mxu0 0.0
    %926 = vmatprep.subr.mxu0 0.0
    %927 = vmatpush1.msra.mxu0 0.0
    %928 = vmatprep.subr.mxu0 0.0
    %929 = vmatpush1.msra.mxu0 0.0
    %930 = vmatprep.subr.mxu0 0.0
    %931 = vmatpush1.msra.mxu0 0.0
    %932 = vmatprep.subr.mxu0 0.0
    %933 = vmatpush1.msra.mxu0 0.0
    %934 = vmatprep.subr.mxu0 0.0
    %935 = vmatpush1.msra.mxu0 0.0
    %936 = vmatprep.subr.mxu0 0.0
    %937 = vmatpush1.msra.mxu0 0.0
    %938 = vmatprep.subr.mxu0 0.0
    %939 = vmatpush1.msra.mxu0 0.0
    %940 = vmatprep.subr.mxu0 0.0
    %941 = vmatpush1.msra.mxu0 %v908
    %942 = vmatprep.subr.mxu0 0.0
    %943 = vmatpush2.msra.mxu0 0.0
    %944 = vmatprep.subr.mxu0 0.0
    %945 = vmatpush2.msra.mxu0 0.0
    %946 = vmatprep.subr.mxu0 0.0
    %947 = vmatpush2.msra.mxu0 0.0
    %948 = vmatprep.subr.mxu0 0.0
    %949 = vmatpush2.msra.mxu0 0.0
    %950 = vmatprep.subr.mxu0 0.0
    %951 = vmatpush2.msra.mxu0 0.0
    %952 = vmatprep.subr.mxu0 0.0
    %953 = vmatpush2.msra.mxu0 0.0
    %954 = vmatprep.subr.mxu0 0.0
    %955 = vmatpush2.msra.mxu0 0.0
    %956 = vmatprep.subr.mxu0 0.0
    %957 = vmatpush2.msra.mxu0 0.0
    %958 = vmatprep.subr.mxu0 0.0
    %959 = vmatpush2.msra.mxu0 0.0
    %960 = vmatprep.subr.mxu0 0.0
    %961 = vmatpush2.msra.mxu0 0.0
    %962 = vmatprep.subr.mxu0 0.0
    %963 = vmatpush2.msra.mxu0 0.0
    %964 = vmatprep.subr.mxu0 0.0
    %965 = vmatpush2.msra.mxu0 0.0
    %966 = vmatprep.subr.mxu0 0.0
    %967 = vmatpush2.msra.mxu0 0.0
    %968 = vmatprep.subr.mxu0 0.0
    %969 = vmatpush2.msra.mxu0 0.0
    %970 = vmatprep.subr.mxu0 0.0
    %971 = vmatpush2.msra.mxu0 0.0
    %972 = vmatprep.subr.mxu0 0.0
    %973 = vmatpush2.msra.mxu0 0.0
    %974 = vmatprep.mubr.f32.mxu0 0.0
    %975 = vmatmul.mubr.f32.gmra.mxu0 %v904
    %v976 = vpop.f32.mrf.mxu0
    %v977 = vadd.f32 0.0, %v976
    %v978 = vpop.f32.mrf.mxu0
    %979 = vdwg.mxu0
    %v980 = vxor.u32 %v977, 2147483648
    %v981 = vmul.f32 %v980, 1.442695
    %v982 = vpow.pop %v981
    %v983 = vadd.f32 %v982, 1.0
    %v984 = vrcp.pop %v983
    %v985 = vmul.f32 1.0, %v984
    %v986 = vlaneseq
    %v987 = vshrl.u32 %v986, 7
    %v988 = vsub.s32 0, %v987
    %v989 = vrot.slane %v985, %v988
    %991 = vbcast.lane.b32.xlu0 %v989, 256
    %v992 = vpop.permute.xlu0 %991
    %s994 = sor.u32 256, 8
    %995 = vbcast.lane.b32.xlu0 %v989, %s994
    %v996 = vpop.permute.xlu0 %995
    %s998 = sor.u32 256, 16
    %999 = vbcast.lane.b32.xlu0 %v989, %s998
    %v1000 = vpop.permute.xlu0 %999
    %s1002 = sor.u32 256, 24
    %1003 = vbcast.lane.b32.xlu0 %v989, %s1002
    %v1004 = vpop.permute.xlu0 %1003
    %s1006 = sor.u32 256, 32
    %1007 = vbcast.lane.b32.xlu0 %v989, %s1006
    %v1008 = vpop.permute.xlu0 %1007
    %s1010 = sor.u32 256, 40
    %1011 = vbcast.lane.b32.xlu0 %v989, %s1010
    %v1012 = vpop.permute.xlu0 %1011
    %s1014 = sor.u32 256, 48
    %1015 = vbcast.lane.b32.xlu0 %v989, %s1014
    %v1016 = vpop.permute.xlu0 %1015
    %s1018 = sor.u32 256, 56
    %1019 = vbcast.lane.b32.xlu0 %v989, %s1018
    %v1020 = vpop.permute.xlu0 %1019
    %v1021 = vlaneseq
    %v1022 = vshrl.u32 %v1021, 7
    %v1023 = vsub.s32 1, %v1022
    %v1024 = vrot.slane %v985, %v1023
    %1026 = vbcast.lane.b32.xlu0 %v1024, 256
    %v1027 = vpop.permute.xlu0 %1026
    %s1029 = sor.u32 256, 8
    %1030 = vbcast.lane.b32.xlu0 %v1024, %s1029
    %v1031 = vpop.permute.xlu0 %1030
    %s1033 = sor.u32 256, 16
    %1034 = vbcast.lane.b32.xlu0 %v1024, %s1033
    %v1035 = vpop.permute.xlu0 %1034
    %s1037 = sor.u32 256, 24
    %1038 = vbcast.lane.b32.xlu0 %v1024, %s1037
    %v1039 = vpop.permute.xlu0 %1038
    %s1041 = sor.u32 256, 32
    %1042 = vbcast.lane.b32.xlu0 %v1024, %s1041
    %v1043 = vpop.permute.xlu0 %1042
    %s1045 = sor.u32 256, 40
    %1046 = vbcast.lane.b32.xlu0 %v1024, %s1045
    %v1047 = vpop.permute.xlu0 %1046
    %s1049 = sor.u32 256, 48
    %1050 = vbcast.lane.b32.xlu0 %v1024, %s1049
    %v1051 = vpop.permute.xlu0 %1050
    %s1053 = sor.u32 256, 56
    %1054 = vbcast.lane.b32.xlu0 %v1024, %s1053
    %v1055 = vpop.permute.xlu0 %1054
    %v1056 = vlaneseq
    %v1057 = vshrl.u32 %v1056, 7
    %v1058 = vsub.s32 2, %v1057
    %v1059 = vrot.slane %v985, %v1058
    %1061 = vbcast.lane.b32.xlu0 %v1059, 256
    %v1062 = vpop.permute.xlu0 %1061
    %s1064 = sor.u32 256, 8
    %1065 = vbcast.lane.b32.xlu0 %v1059, %s1064
    %v1066 = vpop.permute.xlu0 %1065
    %s1068 = sor.u32 256, 16
    %1069 = vbcast.lane.b32.xlu0 %v1059, %s1068
    %v1070 = vpop.permute.xlu0 %1069
    %s1072 = sor.u32 256, 24
    %1073 = vbcast.lane.b32.xlu0 %v1059, %s1072
    %v1074 = vpop.permute.xlu0 %1073
    %s1076 = sor.u32 256, 32
    %1077 = vbcast.lane.b32.xlu0 %v1059, %s1076
    %v1078 = vpop.permute.xlu0 %1077
    %s1080 = sor.u32 256, 40
    %1081 = vbcast.lane.b32.xlu0 %v1059, %s1080
    %v1082 = vpop.permute.xlu0 %1081
    %s1084 = sor.u32 256, 48
    %1085 = vbcast.lane.b32.xlu0 %v1059, %s1084
    %v1086 = vpop.permute.xlu0 %1085
    %s1088 = sor.u32 256, 56
    %1089 = vbcast.lane.b32.xlu0 %v1059, %s1088
    %v1090 = vpop.permute.xlu0 %1089
    %v1091 = vlaneseq
    %v1092 = vshrl.u32 %v1091, 7
    %v1093 = vsub.s32 3, %v1092
    %v1094 = vrot.slane %v985, %v1093
    %1096 = vbcast.lane.b32.xlu0 %v1094, 256
    %v1097 = vpop.permute.xlu0 %1096
    %s1099 = sor.u32 256, 8
    %1100 = vbcast.lane.b32.xlu0 %v1094, %s1099
    %v1101 = vpop.permute.xlu0 %1100
    %s1103 = sor.u32 256, 16
    %1104 = vbcast.lane.b32.xlu0 %v1094, %s1103
    %v1105 = vpop.permute.xlu0 %1104
    %s1107 = sor.u32 256, 24
    %1108 = vbcast.lane.b32.xlu0 %v1094, %s1107
    %v1109 = vpop.permute.xlu0 %1108
    %s1111 = sor.u32 256, 32
    %1112 = vbcast.lane.b32.xlu0 %v1094, %s1111
    %v1113 = vpop.permute.xlu0 %1112
    %s1115 = sor.u32 256, 40
    %1116 = vbcast.lane.b32.xlu0 %v1094, %s1115
    %v1117 = vpop.permute.xlu0 %1116
    %s1119 = sor.u32 256, 48
    %1120 = vbcast.lane.b32.xlu0 %v1094, %s1119
    %v1121 = vpop.permute.xlu0 %1120
    %s1123 = sor.u32 256, 56
    %1124 = vbcast.lane.b32.xlu0 %v1094, %s1123
    %v1125 = vpop.permute.xlu0 %1124
    %v1126 = vlaneseq
    %v1127 = vshrl.u32 %v1126, 7
    %v1128 = vsub.s32 4, %v1127
    %v1129 = vrot.slane %v985, %v1128
    %1131 = vbcast.lane.b32.xlu0 %v1129, 256
    %v1132 = vpop.permute.xlu0 %1131
    %s1134 = sor.u32 256, 8
    %1135 = vbcast.lane.b32.xlu0 %v1129, %s1134
    %v1136 = vpop.permute.xlu0 %1135
    %s1138 = sor.u32 256, 16
    %1139 = vbcast.lane.b32.xlu0 %v1129, %s1138
    %v1140 = vpop.permute.xlu0 %1139
    %s1142 = sor.u32 256, 24
    %1143 = vbcast.lane.b32.xlu0 %v1129, %s1142
    %v1144 = vpop.permute.xlu0 %1143
    %s1146 = sor.u32 256, 32
    %1147 = vbcast.lane.b32.xlu0 %v1129, %s1146
    %v1148 = vpop.permute.xlu0 %1147
    %s1150 = sor.u32 256, 40
    %1151 = vbcast.lane.b32.xlu0 %v1129, %s1150
    %v1152 = vpop.permute.xlu0 %1151
    %s1154 = sor.u32 256, 48
    %1155 = vbcast.lane.b32.xlu0 %v1129, %s1154
    %v1156 = vpop.permute.xlu0 %1155
    %s1158 = sor.u32 256, 56
    %1159 = vbcast.lane.b32.xlu0 %v1129, %s1158
    %v1160 = vpop.permute.xlu0 %1159
    %v1161 = vlaneseq
    %v1162 = vshrl.u32 %v1161, 7
    %v1163 = vsub.s32 5, %v1162
    %v1164 = vrot.slane %v985, %v1163
    %1166 = vbcast.lane.b32.xlu0 %v1164, 256
    %v1167 = vpop.permute.xlu0 %1166
    %s1169 = sor.u32 256, 8
    %1170 = vbcast.lane.b32.xlu0 %v1164, %s1169
    %v1171 = vpop.permute.xlu0 %1170
    %s1173 = sor.u32 256, 16
    %1174 = vbcast.lane.b32.xlu0 %v1164, %s1173
    %v1175 = vpop.permute.xlu0 %1174
    %s1177 = sor.u32 256, 24
    %1178 = vbcast.lane.b32.xlu0 %v1164, %s1177
    %v1179 = vpop.permute.xlu0 %1178
    %s1181 = sor.u32 256, 32
    %1182 = vbcast.lane.b32.xlu0 %v1164, %s1181
    %v1183 = vpop.permute.xlu0 %1182
    %s1185 = sor.u32 256, 40
    %1186 = vbcast.lane.b32.xlu0 %v1164, %s1185
    %v1187 = vpop.permute.xlu0 %1186
    %s1189 = sor.u32 256, 48
    %1190 = vbcast.lane.b32.xlu0 %v1164, %s1189
    %v1191 = vpop.permute.xlu0 %1190
    %s1193 = sor.u32 256, 56
    %1194 = vbcast.lane.b32.xlu0 %v1164, %s1193
    %v1195 = vpop.permute.xlu0 %1194
    %v1196 = vlaneseq
    %v1197 = vshrl.u32 %v1196, 7
    %v1198 = vsub.s32 6, %v1197
    %v1199 = vrot.slane %v985, %v1198
    %1201 = vbcast.lane.b32.xlu0 %v1199, 256
    %v1202 = vpop.permute.xlu0 %1201
    %s1204 = sor.u32 256, 8
    %1205 = vbcast.lane.b32.xlu0 %v1199, %s1204
    %v1206 = vpop.permute.xlu0 %1205
    %s1208 = sor.u32 256, 16
    %1209 = vbcast.lane.b32.xlu0 %v1199, %s1208
    %v1210 = vpop.permute.xlu0 %1209
    %s1212 = sor.u32 256, 24
    %1213 = vbcast.lane.b32.xlu0 %v1199, %s1212
    %v1214 = vpop.permute.xlu0 %1213
    %s1216 = sor.u32 256, 32
    %1217 = vbcast.lane.b32.xlu0 %v1199, %s1216
    %v1218 = vpop.permute.xlu0 %1217
    %s1220 = sor.u32 256, 40
    %1221 = vbcast.lane.b32.xlu0 %v1199, %s1220
    %v1222 = vpop.permute.xlu0 %1221
    %s1224 = sor.u32 256, 48
    %1225 = vbcast.lane.b32.xlu0 %v1199, %s1224
    %v1226 = vpop.permute.xlu0 %1225
    %s1228 = sor.u32 256, 56
    %1229 = vbcast.lane.b32.xlu0 %v1199, %s1228
    %v1230 = vpop.permute.xlu0 %1229
    %v1231 = vlaneseq
    %v1232 = vshrl.u32 %v1231, 7
    %v1233 = vsub.s32 7, %v1232
    %v1234 = vrot.slane %v985, %v1233
    %1236 = vbcast.lane.b32.xlu0 %v1234, 256
    %v1237 = vpop.permute.xlu0 %1236
    %s1239 = sor.u32 256, 8
    %1240 = vbcast.lane.b32.xlu0 %v1234, %s1239
    %v1241 = vpop.permute.xlu0 %1240
    %s1243 = sor.u32 256, 16
    %1244 = vbcast.lane.b32.xlu0 %v1234, %s1243
    %v1245 = vpop.permute.xlu0 %1244
    %s1247 = sor.u32 256, 24
    %1248 = vbcast.lane.b32.xlu0 %v1234, %s1247
    %v1249 = vpop.permute.xlu0 %1248
    %s1251 = sor.u32 256, 32
    %1252 = vbcast.lane.b32.xlu0 %v1234, %s1251
    %v1253 = vpop.permute.xlu0 %1252
    %s1255 = sor.u32 256, 40
    %1256 = vbcast.lane.b32.xlu0 %v1234, %s1255
    %v1257 = vpop.permute.xlu0 %1256
    %s1259 = sor.u32 256, 48
    %1260 = vbcast.lane.b32.xlu0 %v1234, %s1259
    %v1261 = vpop.permute.xlu0 %1260
    %s1263 = sor.u32 256, 56
    %1264 = vbcast.lane.b32.xlu0 %v1234, %s1263
    %v1265 = vpop.permute.xlu0 %1264
    %v1266 = vmul.f32 %v29, %v992
    %v1267 = vmul.f32 %v30, %v992
    %v1268 = vmul.f32 %v31, %v996
    %v1269 = vmul.f32 %v32, %v996
    %v1270 = vmul.f32 %v33, %v1000
    %v1271 = vmul.f32 %v34, %v1000
    %v1272 = vmul.f32 %v35, %v1004
    %v1273 = vmul.f32 %v36, %v1004
    %v1274 = vmul.f32 %v37, %v1008
    %v1275 = vmul.f32 %v38, %v1008
    %v1276 = vmul.f32 %v39, %v1012
    %v1277 = vmul.f32 %v40, %v1012
    %v1278 = vmul.f32 %v41, %v1016
    %v1279 = vmul.f32 %v42, %v1016
    %v1280 = vmul.f32 %v43, %v1020
    %v1281 = vmul.f32 %v44, %v1020
    %v1282 = vmul.f32 %v45, %v1027
    %v1283 = vmul.f32 %v46, %v1027
    %v1284 = vmul.f32 %v47, %v1031
    %v1285 = vmul.f32 %v48, %v1031
    %v1286 = vmul.f32 %v49, %v1035
    %v1287 = vmul.f32 %v50, %v1035
    %v1288 = vmul.f32 %v51, %v1039
    %v1289 = vmul.f32 %v52, %v1039
    %v1290 = vmul.f32 %v53, %v1043
    %v1291 = vmul.f32 %v54, %v1043
    %v1292 = vmul.f32 %v55, %v1047
    %v1293 = vmul.f32 %v56, %v1047
    %v1294 = vmul.f32 %v57, %v1051
    %v1295 = vmul.f32 %v58, %v1051
    %v1296 = vmul.f32 %v59, %v1055
    %v1297 = vmul.f32 %v60, %v1055
    %v1298 = vmul.f32 %v61, %v1062
    %v1299 = vmul.f32 %v62, %v1062
    %v1300 = vmul.f32 %v63, %v1066
    %v1301 = vmul.f32 %v64, %v1066
    %v1302 = vmul.f32 %v65, %v1070
    %v1303 = vmul.f32 %v66, %v1070
    %v1304 = vmul.f32 %v67, %v1074
    %v1305 = vmul.f32 %v68, %v1074
    %v1306 = vmul.f32 %v69, %v1078
    %v1307 = vmul.f32 %v70, %v1078
    %v1308 = vmul.f32 %v71, %v1082
    %v1309 = vmul.f32 %v72, %v1082
    %v1310 = vmul.f32 %v73, %v1086
    %v1311 = vmul.f32 %v74, %v1086
    %v1312 = vmul.f32 %v75, %v1090
    %v1313 = vmul.f32 %v76, %v1090
    %v1314 = vmul.f32 %v77, %v1097
    %v1315 = vmul.f32 %v78, %v1097
    %v1316 = vmul.f32 %v79, %v1101
    %v1317 = vmul.f32 %v80, %v1101
    %v1318 = vmul.f32 %v81, %v1105
    %v1319 = vmul.f32 %v82, %v1105
    %v1320 = vmul.f32 %v83, %v1109
    %v1321 = vmul.f32 %v84, %v1109
    %v1322 = vmul.f32 %v85, %v1113
    %v1323 = vmul.f32 %v86, %v1113
    %v1324 = vmul.f32 %v87, %v1117
    %v1325 = vmul.f32 %v88, %v1117
    %v1326 = vmul.f32 %v89, %v1121
    %v1327 = vmul.f32 %v90, %v1121
    %v1328 = vmul.f32 %v91, %v1125
    %v1329 = vmul.f32 %v92, %v1125
    %v1330 = vmul.f32 %v93, %v1132
    %v1331 = vmul.f32 %v94, %v1132
    %v1332 = vmul.f32 %v95, %v1136
    %v1333 = vmul.f32 %v96, %v1136
    %v1334 = vmul.f32 %v97, %v1140
    %v1335 = vmul.f32 %v98, %v1140
    %v1336 = vmul.f32 %v99, %v1144
    %v1337 = vmul.f32 %v100, %v1144
    %v1338 = vmul.f32 %v101, %v1148
    %v1339 = vmul.f32 %v102, %v1148
    %v1340 = vmul.f32 %v103, %v1152
    %v1341 = vmul.f32 %v104, %v1152
    %v1342 = vmul.f32 %v105, %v1156
    %v1343 = vmul.f32 %v106, %v1156
    %v1344 = vmul.f32 %v107, %v1160
    %v1345 = vmul.f32 %v108, %v1160
    %v1346 = vmul.f32 %v109, %v1167
    %v1347 = vmul.f32 %v110, %v1167
    %v1348 = vmul.f32 %v111, %v1171
    %v1349 = vmul.f32 %v112, %v1171
    %v1350 = vmul.f32 %v113, %v1175
    %v1351 = vmul.f32 %v114, %v1175
    %v1352 = vmul.f32 %v115, %v1179
    %v1353 = vmul.f32 %v116, %v1179
    %v1354 = vmul.f32 %v117, %v1183
    %v1355 = vmul.f32 %v118, %v1183
    %v1356 = vmul.f32 %v119, %v1187
    %v1357 = vmul.f32 %v120, %v1187
    %v1358 = vmul.f32 %v121, %v1191
    %v1359 = vmul.f32 %v122, %v1191
    %v1360 = vmul.f32 %v123, %v1195
    %v1361 = vmul.f32 %v124, %v1195
    %v1362 = vmul.f32 %v125, %v1202
    %v1363 = vmul.f32 %v126, %v1202
    %v1364 = vmul.f32 %v127, %v1206
    %v1365 = vmul.f32 %v128, %v1206
    %v1366 = vmul.f32 %v129, %v1210
    %v1367 = vmul.f32 %v130, %v1210
    %v1368 = vmul.f32 %v131, %v1214
    %v1369 = vmul.f32 %v132, %v1214
    %v1370 = vmul.f32 %v133, %v1218
    %v1371 = vmul.f32 %v134, %v1218
    %v1372 = vmul.f32 %v135, %v1222
    %v1373 = vmul.f32 %v136, %v1222
    %v1374 = vmul.f32 %v137, %v1226
    %v1375 = vmul.f32 %v138, %v1226
    %v1376 = vmul.f32 %v139, %v1230
    %v1377 = vmul.f32 %v140, %v1230
    %v1378 = vmul.f32 %v141, %v1237
    %v1379 = vmul.f32 %v142, %v1237
    %v1380 = vmul.f32 %v143, %v1241
    %v1381 = vmul.f32 %v144, %v1241
    %v1382 = vmul.f32 %v145, %v1245
    %v1383 = vmul.f32 %v146, %v1245
    %v1384 = vmul.f32 %v147, %v1249
    %v1385 = vmul.f32 %v148, %v1249
    %v1386 = vmul.f32 %v149, %v1253
    %v1387 = vmul.f32 %v150, %v1253
    %v1388 = vmul.f32 %v151, %v1257
    %v1389 = vmul.f32 %v152, %v1257
    %v1390 = vmul.f32 %v153, %v1261
    %v1391 = vmul.f32 %v154, %v1261
    %v1392 = vmul.f32 %v155, %v1265
    %v1393 = vmul.f32 %v156, %v1265
    %1394 = vst [vmem:[#allocation5] sm:$0xff] %v1266
    %1395 = vst [vmem:[#allocation5 + $0x8] sm:$0xff] %v1267
    %1396 = vst [vmem:[#allocation5 + $0x10] sm:$0xff] %v1268
    %1397 = vst [vmem:[#allocation5 + $0x18] sm:$0xff] %v1269
    %1398 = vst [vmem:[#allocation5 + $0x20] sm:$0xff] %v1270
    %1399 = vst [vmem:[#allocation5 + $0x28] sm:$0xff] %v1271
    %1400 = vst [vmem:[#allocation5 + $0x30] sm:$0xff] %v1272
    %1401 = vst [vmem:[#allocation5 + $0x38] sm:$0xff] %v1273
    %1402 = vst [vmem:[#allocation5 + $0x40] sm:$0xff] %v1274
    %1403 = vst [vmem:[#allocation5 + $0x48] sm:$0xff] %v1275
    %1404 = vst [vmem:[#allocation5 + $0x50] sm:$0xff] %v1276
    %1405 = vst [vmem:[#allocation5 + $0x58] sm:$0xff] %v1277
    %1406 = vst [vmem:[#allocation5 + $0x60] sm:$0xff] %v1278
    %1407 = vst [vmem:[#allocation5 + $0x68] sm:$0xff] %v1279
    %1408 = vst [vmem:[#allocation5 + $0x70] sm:$0xff] %v1280
    %1409 = vst [vmem:[#allocation5 + $0x78] sm:$0xff] %v1281
    %1410 = vst [vmem:[#allocation5 + $0x80] sm:$0xff] %v1282
    %1411 = vst [vmem:[#allocation5 + $0x88] sm:$0xff] %v1283
    %1412 = vst [vmem:[#allocation5 + $0x90] sm:$0xff] %v1284
    %1413 = vst [vmem:[#allocation5 + $0x98] sm:$0xff] %v1285
    %1414 = vst [vmem:[#allocation5 + $0xa0] sm:$0xff] %v1286
    %1415 = vst [vmem:[#allocation5 + $0xa8] sm:$0xff] %v1287
    %1416 = vst [vmem:[#allocation5 + $0xb0] sm:$0xff] %v1288
    %1417 = vst [vmem:[#allocation5 + $0xb8] sm:$0xff] %v1289
    %1418 = vst [vmem:[#allocation5 + $0xc0] sm:$0xff] %v1290
    %1419 = vst [vmem:[#allocation5 + $0xc8] sm:$0xff] %v1291
    %1420 = vst [vmem:[#allocation5 + $0xd0] sm:$0xff] %v1292
    %1421 = vst [vmem:[#allocation5 + $0xd8] sm:$0xff] %v1293
    %1422 = vst [vmem:[#allocation5 + $0xe0] sm:$0xff] %v1294
    %1423 = vst [vmem:[#allocation5 + $0xe8] sm:$0xff] %v1295
    %1424 = vst [vmem:[#allocation5 + $0xf0] sm:$0xff] %v1296
    %1425 = vst [vmem:[#allocation5 + $0xf8] sm:$0xff] %v1297
    %1426 = vst [vmem:[#allocation5 + $0x100] sm:$0xff] %v1298
    %1427 = vst [vmem:[#allocation5 + $0x108] sm:$0xff] %v1299
    %1428 = vst [vmem:[#allocation5 + $0x110] sm:$0xff] %v1300
    %1429 = vst [vmem:[#allocation5 + $0x118] sm:$0xff] %v1301
    %1430 = vst [vmem:[#allocation5 + $0x120] sm:$0xff] %v1302
    %1431 = vst [vmem:[#allocation5 + $0x128] sm:$0xff] %v1303
    %1432 = vst [vmem:[#allocation5 + $0x130] sm:$0xff] %v1304
    %1433 = vst [vmem:[#allocation5 + $0x138] sm:$0xff] %v1305
    %1434 = vst [vmem:[#allocation5 + $0x140] sm:$0xff] %v1306
    %1435 = vst [vmem:[#allocation5 + $0x148] sm:$0xff] %v1307
    %1436 = vst [vmem:[#allocation5 + $0x150] sm:$0xff] %v1308
    %1437 = vst [vmem:[#allocation5 + $0x158] sm:$0xff] %v1309
    %1438 = vst [vmem:[#allocation5 + $0x160] sm:$0xff] %v1310
    %1439 = vst [vmem:[#allocation5 + $0x168] sm:$0xff] %v1311
    %1440 = vst [vmem:[#allocation5 + $0x170] sm:$0xff] %v1312
    %1441 = vst [vmem:[#allocation5 + $0x178] sm:$0xff] %v1313
    %1442 = vst [vmem:[#allocation5 + $0x180] sm:$0xff] %v1314
    %1443 = vst [vmem:[#allocation5 + $0x188] sm:$0xff] %v1315
    %1444 = vst [vmem:[#allocation5 + $0x190] sm:$0xff] %v1316
    %1445 = vst [vmem:[#allocation5 + $0x198] sm:$0xff] %v1317
    %1446 = vst [vmem:[#allocation5 + $0x1a0] sm:$0xff] %v1318
    %1447 = vst [vmem:[#allocation5 + $0x1a8] sm:$0xff] %v1319
    %1448 = vst [vmem:[#allocation5 + $0x1b0] sm:$0xff] %v1320
    %1449 = vst [vmem:[#allocation5 + $0x1b8] sm:$0xff] %v1321
    %1450 = vst [vmem:[#allocation5 + $0x1c0] sm:$0xff] %v1322
    %1451 = vst [vmem:[#allocation5 + $0x1c8] sm:$0xff] %v1323
    %1452 = vst [vmem:[#allocation5 + $0x1d0] sm:$0xff] %v1324
    %1453 = vst [vmem:[#allocation5 + $0x1d8] sm:$0xff] %v1325
    %1454 = vst [vmem:[#allocation5 + $0x1e0] sm:$0xff] %v1326
    %1455 = vst [vmem:[#allocation5 + $0x1e8] sm:$0xff] %v1327
    %1456 = vst [vmem:[#allocation5 + $0x1f0] sm:$0xff] %v1328
    %1457 = vst [vmem:[#allocation5 + $0x1f8] sm:$0xff] %v1329
    %1458 = vst [vmem:[#allocation5 + $0x200] sm:$0xff] %v1330
    %1459 = vst [vmem:[#allocation5 + $0x208] sm:$0xff] %v1331
    %1460 = vst [vmem:[#allocation5 + $0x210] sm:$0xff] %v1332
    %1461 = vst [vmem:[#allocation5 + $0x218] sm:$0xff] %v1333
    %1462 = vst [vmem:[#allocation5 + $0x220] sm:$0xff] %v1334
    %1463 = vst [vmem:[#allocation5 + $0x228] sm:$0xff] %v1335
    %1464 = vst [vmem:[#allocation5 + $0x230] sm:$0xff] %v1336
    %1465 = vst [vmem:[#allocation5 + $0x238] sm:$0xff] %v1337
    %1466 = vst [vmem:[#allocation5 + $0x240] sm:$0xff] %v1338
    %1467 = vst [vmem:[#allocation5 + $0x248] sm:$0xff] %v1339
    %1468 = vst [vmem:[#allocation5 + $0x250] sm:$0xff] %v1340
    %1469 = vst [vmem:[#allocation5 + $0x258] sm:$0xff] %v1341
    %1470 = vst [vmem:[#allocation5 + $0x260] sm:$0xff] %v1342
    %1471 = vst [vmem:[#allocation5 + $0x268] sm:$0xff] %v1343
    %1472 = vst [vmem:[#allocation5 + $0x270] sm:$0xff] %v1344
    %1473 = vst [vmem:[#allocation5 + $0x278] sm:$0xff] %v1345
    %1474 = vst [vmem:[#allocation5 + $0x280] sm:$0xff] %v1346
    %1475 = vst [vmem:[#allocation5 + $0x288] sm:$0xff] %v1347
    %1476 = vst [vmem:[#allocation5 + $0x290] sm:$0xff] %v1348
    %1477 = vst [vmem:[#allocation5 + $0x298] sm:$0xff] %v1349
    %1478 = vst [vmem:[#allocation5 + $0x2a0] sm:$0xff] %v1350
    %1479 = vst [vmem:[#allocation5 + $0x2a8] sm:$0xff] %v1351
    %1480 = vst [vmem:[#allocation5 + $0x2b0] sm:$0xff] %v1352
    %1481 = vst [vmem:[#allocation5 + $0x2b8] sm:$0xff] %v1353
    %1482 = vst [vmem:[#allocation5 + $0x2c0] sm:$0xff] %v1354
    %1483 = vst [vmem:[#allocation5 + $0x2c8] sm:$0xff] %v1355
    %1484 = vst [vmem:[#allocation5 + $0x2d0] sm:$0xff] %v1356
    %1485 = vst [vmem:[#allocation5 + $0x2d8] sm:$0xff] %v1357
    %1486 = vst [vmem:[#allocation5 + $0x2e0] sm:$0xff] %v1358
    %1487 = vst [vmem:[#allocation5 + $0x2e8] sm:$0xff] %v1359
    %1488 = vst [vmem:[#allocation5 + $0x2f0] sm:$0xff] %v1360
    %1489 = vst [vmem:[#allocation5 + $0x2f8] sm:$0xff] %v1361
    %1490 = vst [vmem:[#allocation5 + $0x300] sm:$0xff] %v1362
    %1491 = vst [vmem:[#allocation5 + $0x308] sm:$0xff] %v1363
    %1492 = vst [vmem:[#allocation5 + $0x310] sm:$0xff] %v1364
    %1493 = vst [vmem:[#allocation5 + $0x318] sm:$0xff] %v1365
    %1494 = vst [vmem:[#allocation5 + $0x320] sm:$0xff] %v1366
    %1495 = vst [vmem:[#allocation5 + $0x328] sm:$0xff] %v1367
    %1496 = vst [vmem:[#allocation5 + $0x330] sm:$0xff] %v1368
    %1497 = vst [vmem:[#allocation5 + $0x338] sm:$0xff] %v1369
    %1498 = vst [vmem:[#allocation5 + $0x340] sm:$0xff] %v1370
    %1499 = vst [vmem:[#allocation5 + $0x348] sm:$0xff] %v1371
    %1500 = vst [vmem:[#allocation5 + $0x350] sm:$0xff] %v1372
    %1501 = vst [vmem:[#allocation5 + $0x358] sm:$0xff] %v1373
    %1502 = vst [vmem:[#allocation5 + $0x360] sm:$0xff] %v1374
    %1503 = vst [vmem:[#allocation5 + $0x368] sm:$0xff] %v1375
    %1504 = vst [vmem:[#allocation5 + $0x370] sm:$0xff] %v1376
    %1505 = vst [vmem:[#allocation5 + $0x378] sm:$0xff] %v1377
    %1506 = vst [vmem:[#allocation5 + $0x380] sm:$0xff] %v1378
    %1507 = vst [vmem:[#allocation5 + $0x388] sm:$0xff] %v1379
    %1508 = vst [vmem:[#allocation5 + $0x390] sm:$0xff] %v1380
    %1509 = vst [vmem:[#allocation5 + $0x398] sm:$0xff] %v1381
    %1510 = vst [vmem:[#allocation5 + $0x3a0] sm:$0xff] %v1382
    %1511 = vst [vmem:[#allocation5 + $0x3a8] sm:$0xff] %v1383
    %1512 = vst [vmem:[#allocation5 + $0x3b0] sm:$0xff] %v1384
    %1513 = vst [vmem:[#allocation5 + $0x3b8] sm:$0xff] %v1385
    %1514 = vst [vmem:[#allocation5 + $0x3c0] sm:$0xff] %v1386
    %1515 = vst [vmem:[#allocation5 + $0x3c8] sm:$0xff] %v1387
    %1516 = vst [vmem:[#allocation5 + $0x3d0] sm:$0xff] %v1388
    %1517 = vst [vmem:[#allocation5 + $0x3d8] sm:$0xff] %v1389
    %1518 = vst [vmem:[#allocation5 + $0x3e0] sm:$0xff] %v1390
    %1519 = vst [vmem:[#allocation5 + $0x3e8] sm:$0xff] %v1391
    %1520 = vst [vmem:[#allocation5 + $0x3f0] sm:$0xff] %v1392
    %1521 = vst [vmem:[#allocation5 + $0x3f8] sm:$0xff] %v1393
    // Predicated region
    $region18: #{tpu_custom_call.1} parent=1 // pred_check
      _
    $region19: #{tpu_custom_call.1} parent=1 // pred_check_branch
      %1523 = sbr.rel (0) target = $region21
    $region20: #{tpu_custom_call.1} parent=1 // pred_region
      %s1525 = ssub.s32 16384, 16384
      %1526 = vsyncadd [#allocation4], %s1525
      %s1527 = sshll.u32 [#allocation5], 4
      %s1528 = int_to_ptr.vmem [resolvable:$true] %s1527
      %1533 = dma.vmem_to_hbm [thread:$0]  %s1528, 16384, %s3, [#allocation4], 256, 256, 16
    $region21: #{tpu_custom_call.1} parent=1 // pred_fallthru
      _
    // Predicated region
    $region22: #{tpu_custom_call.1} parent=1 // pred_check
      _
    $region23: #{tpu_custom_call.1} parent=1 // pred_check_branch
      %1535 = sbr.rel (0) target = $region25
    $region24: #{tpu_custom_call.1} parent=1 // pred_region
      %1536 = dma.done [#allocation4], 16384
    $region25: #{tpu_custom_call.1} parent=1 // pred_fallthru
      _
    %1537 = vsyncpa [#allocation3], 1
    %1538 = vsyncpa [#allocation4], 1

</llo_original>
